<compile_context>
chip_gen: v5e
topology: v5e:2x2
jax: 0.10.0
libtpu: 0.0.40
codegen_flags: <defaults>
</compile_context>

<pallas_src>
import functools

import jax
import jax.numpy as jnp
from jax.experimental import pallas as pl
from jax.experimental.pallas import tpu as pltpu

C_IN = 4
CONV_OUT = (8, 8)           # conv_0_out_ch, conv_1_out_ch
SCORE_OUT = 1
COORD_OUT = 4
INDEX_OUT = (8, 8)          # index_0_out_ch, index_1_out_ch
BOTTLENECK = sum(CONV_OUT)                 # 16
HID = INDEX_OUT[0] + INDEX_OUT[0]          # 16 (line hidden + y hidden)
HEADS1 = HID + SCORE_OUT + COORD_OUT       # 21
INDEX_TOTAL = 2 * INDEX_OUT[1]             # 16
MAX_TILE = 2048            # lane-dim tile over pixels (multiple of 128)


def _pick_tile(hw):
    """Largest pixel tile (multiple of 128, <= MAX_TILE) dividing hw; else pad."""
    for t in (2048, 1024, 512, 256, 128):
        if t <= MAX_TILE and hw % t == 0:
            return t, hw
    hw_pad = ((hw + 127) // 128) * 128
    return 128, hw_pad


# ---------------------------------------------------------------------------
# Kernel: 3 fused matmuls per (C, TILE) pixel tile, lane-dense I/O.
# ---------------------------------------------------------------------------
def rpn_kernel(x_ref,
               w1, b1,      # (16, 4),  (16, 1)   fused conv branches
               w2, b2,      # (21, 16), (21, 1)   fused [line0 | y0 | score | coord]
               w3, b3,      # (16, 16), (16, 1)   block-diag [line1 (+) y1]
               coord_ref, score_ref, index_ref):
    x = x_ref[...]                                               # (C_IN, TILE)

    # fused conv branches -> bottleneck (both branches are relu, so one relu).
    bn = jnp.maximum(
        jnp.dot(w1[...], x, preferred_element_type=jnp.float32) + b1[...], 0.0)

    # fused first-layer heads: rows [0:16]=line_h|y_h, [16]=score, [17:21]=coord.
    h = jnp.dot(w2[...], bn, preferred_element_type=jnp.float32) + b2[...]

    score_ref[...] = jax.nn.sigmoid(h[HID:HID + SCORE_OUT, :])
    coord_ref[...] = h[HID + SCORE_OUT:HID + SCORE_OUT + COORD_OUT, :]

    hid = jnp.maximum(h[0:HID, :], 0.0)                          # (16, TILE)

    # block-diagonal second layer: index = concat([line, y], channel).
    index_ref[...] = jnp.maximum(
        jnp.dot(w3[...], hid, preferred_element_type=jnp.float32) + b3[...], 0.0)


# ---------------------------------------------------------------------------
# Parameters (same per-layer shapes as the PyTorch module, packed for kernel).
# ---------------------------------------------------------------------------
def init_params(key):
    def dense_params(key, cin, cout):
        kw, kb = jax.random.split(key)
        scale = 1.0 / jnp.sqrt(jnp.float32(cin))
        w = jax.random.normal(kw, (cin, cout), jnp.float32) * scale
        b = jax.random.normal(kb, (1, cout), jnp.float32) * 0.01
        return w, b

    keys = jax.random.split(key, 8)
    params = []
    params += dense_params(keys[0], C_IN, CONV_OUT[0])           # wc0, bc0
    params += dense_params(keys[1], C_IN, CONV_OUT[1])           # wc1, bc1
    params += dense_params(keys[2], BOTTLENECK, SCORE_OUT)       # ws,  bs
    params += dense_params(keys[3], BOTTLENECK, COORD_OUT)       # wco, bco
    params += dense_params(keys[4], BOTTLENECK, INDEX_OUT[0])    # wl0, bl0
    params += dense_params(keys[5], INDEX_OUT[0], INDEX_OUT[1])  # wl1, bl1
    params += dense_params(keys[6], BOTTLENECK, INDEX_OUT[0])    # wy0, by0
    params += dense_params(keys[7], INDEX_OUT[0], INDEX_OUT[1])  # wy1, by1
    return tuple(params)


def pack_params(params):
    """Pack 16 per-layer tensors into 3 fused (transposed) weights + 3 biases."""
    (wc0, bc0, wc1, bc1, ws, bs, wco, bco,
     wl0, bl0, wl1, bl1, wy0, by0, wy1, by1) = params

    w1 = jnp.concatenate([wc0, wc1], axis=1).T                   # (16, 4)
    b1 = jnp.concatenate([bc0, bc1], axis=1).T                   # (16, 1)

    # fused heads, row order: line_h | y_h | score | coord
    w2 = jnp.concatenate([wl0, wy0, ws, wco], axis=1).T          # (21, 16)
    b2 = jnp.concatenate([bl0, by0, bs, bco], axis=1).T          # (21, 1)

    z = jnp.zeros((INDEX_OUT[1], INDEX_OUT[0]), jnp.float32)
    w3 = jnp.concatenate(
        [jnp.concatenate([wl1.T, z], axis=1),
         jnp.concatenate([z, wy1.T], axis=1)], axis=0)           # (16, 16)
    b3 = jnp.concatenate([bl1, by1], axis=1).T                   # (16, 1)
    return (w1, b1, w2, b2, w3, b3)


# ---------------------------------------------------------------------------
# Wrapper: no transposes, NCHW in / NCHW out.
# ---------------------------------------------------------------------------
@functools.partial(jax.jit, static_argnames=("image_size",))
def region_proposal_network(x_nchw, wide_grounds, image_size, params):
    # wide_grounds / image_size are unused in the 'ResNet34' branch (matches PyTorch).
    del wide_grounds, image_size
    B, C, H, W = x_nchw.shape
    assert C == C_IN
    hw = H * W
    tile, hw_pad = _pick_tile(hw)

    x3d = x_nchw.reshape(B, C, hw).astype(jnp.float32)
    if hw_pad != hw:
        x3d = jnp.pad(x3d, ((0, 0), (0, 0), (0, hw_pad - hw)))

    packed = pack_params(params)

    def wspec(a):
        nd = a.ndim
        return pl.BlockSpec(a.shape, lambda b, j, _nd=nd: (0,) * _nd)

    in_specs = [pl.BlockSpec((None, C_IN, tile), lambda b, j: (b, 0, j))]
    in_specs += [wspec(p) for p in packed]

    out_shapes = (
        jax.ShapeDtypeStruct((B, COORD_OUT, hw_pad), jnp.float32),
        jax.ShapeDtypeStruct((B, SCORE_OUT, hw_pad), jnp.float32),
        jax.ShapeDtypeStruct((B, INDEX_TOTAL, hw_pad), jnp.float32),
    )
    out_specs = (
        pl.BlockSpec((None, COORD_OUT, tile), lambda b, j: (b, 0, j)),
        pl.BlockSpec((None, SCORE_OUT, tile), lambda b, j: (b, 0, j)),
        pl.BlockSpec((None, INDEX_TOTAL, tile), lambda b, j: (b, 0, j)),
    )

    coord3, score3, index3 = pl.pallas_call(
        rpn_kernel,
        out_shape=out_shapes,
        grid=(B, hw_pad // tile),
        in_specs=in_specs,
        out_specs=out_specs,
        compiler_params=pltpu.CompilerParams(
            dimension_semantics=("parallel", "parallel")),
    )(x3d, *packed)

    def to_nchw(a):
        if hw_pad != hw:
            a = a[..., :hw]
        return a.reshape(B, -1, H, W)

    # returns (coord, score, index) in NCHW, same as the PyTorch module.
    return to_nchw(coord3), to_nchw(score3), to_nchw(index3)


# ---------------------------------------------------------------------------
# Pure-JAX reference (unfused, original per-layer weights) for correctness.
# ---------------------------------------------------------------------------
def reference_forward(x_nchw, params):
    (wc0, bc0, wc1, bc1, ws, bs, wco, bco,
     wl0, bl0, wl1, bl1, wy0, by0, wy1, by1) = params
    B, C, H, W = x_nchw.shape
    x2d = jnp.transpose(x_nchw, (0, 2, 3, 1)).reshape(B * H * W, C)
    b0 = jax.nn.relu(x2d @ wc0 + bc0)
    b1 = jax.nn.relu(x2d @ wc1 + bc1)
    bn = jnp.concatenate([b0, b1], -1)
    score = jax.nn.sigmoid(bn @ ws + bs)
    coord = bn @ wco + bco
    line = jax.nn.relu(jax.nn.relu(bn @ wl0 + bl0) @ wl1 + bl1)
    y = jax.nn.relu(jax.nn.relu(bn @ wy0 + by0) @ wy1 + by1)
    index = jnp.concatenate([line, y], -1)
    to_nchw = lambda a: jnp.transpose(a.reshape(B, H, W, -1), (0, 3, 1, 2))
    return to_nchw(coord), to_nchw(score), to_nchw(index)


if __name__ == "__main__":
    key = jax.random.PRNGKey(0)
    k_x, k_g, k_p = jax.random.split(key, 3)

    B, C, H, W = 2, C_IN, 16, 16
    x = jax.random.normal(k_x, (B, C, H, W), jnp.float32)
    wide_grounds = jax.random.normal(k_g, (B, 4), jnp.float32)   # unused in this branch
    image_size = (B, C, 64, 64)

    params = init_params(k_p)

    coord, score, index = region_proposal_network(x, wide_grounds, image_size, params)
    jax.block_until_ready((coord, score, index))

    coord_r, score_r, index_r = reference_forward(x, params)
    assert coord.shape == (B, COORD_OUT, H, W)
    assert score.shape == (B, SCORE_OUT, H, W)
    assert index.shape == (B, INDEX_TOTAL, H, W)
    assert jnp.allclose(coord, coord_r, atol=1e-5, rtol=1e-5)
    assert jnp.allclose(score, score_r, atol=1e-5, rtol=1e-5)
    assert jnp.allclose(index, index_r, atol=1e-5, rtol=1e-5)

    print("KERNEL_OK")
</pallas_src>

<mosaic_0001>
module attributes {stable_mosaic.version = 11 : i64} {
  func.func @rpn_kernel(%arg0: i32, %arg1: i32, %arg2: memref<1x4x256xf32, #tpu.memory_space<vmem>>, %arg3: memref<16x4xf32, #tpu.memory_space<vmem>>, %arg4: memref<16x1xf32, #tpu.memory_space<vmem>>, %arg5: memref<21x16xf32, #tpu.memory_space<vmem>>, %arg6: memref<21x1xf32, #tpu.memory_space<vmem>>, %arg7: memref<16x16xf32, #tpu.memory_space<vmem>>, %arg8: memref<16x1xf32, #tpu.memory_space<vmem>>, %arg9: memref<1x4x256xf32, #tpu.memory_space<vmem>>, %arg10: memref<1x1x256xf32, #tpu.memory_space<vmem>>, %arg11: memref<1x16x256xf32, #tpu.memory_space<vmem>>) attributes {dimension_semantics = [#tpu.dimension_semantics<parallel>, #tpu.dimension_semantics<parallel>], iteration_bounds = array<i64: 2, 1>, scalar_prefetch = 0 : i64, scratch_operands = 0 : i64, tpu.core_type = #tpu.core_type<tc>, window_params = [{transform_indices = @transform_0, window_bounds = array<i64: 1, 4, 256>}, {pipeline_mode = #tpu.pipeline_mode<synchronous>, transform_indices = @transform_1, window_bounds = array<i64: 16, 4>}, {pipeline_mode = #tpu.pipeline_mode<synchronous>, transform_indices = @transform_2, window_bounds = array<i64: 16, 1>}, {pipeline_mode = #tpu.pipeline_mode<synchronous>, transform_indices = @transform_3, window_bounds = array<i64: 21, 16>}, {pipeline_mode = #tpu.pipeline_mode<synchronous>, transform_indices = @transform_4, window_bounds = array<i64: 21, 1>}, {pipeline_mode = #tpu.pipeline_mode<synchronous>, transform_indices = @transform_5, window_bounds = array<i64: 16, 16>}, {pipeline_mode = #tpu.pipeline_mode<synchronous>, transform_indices = @transform_6, window_bounds = array<i64: 16, 1>}, {transform_indices = @transform_7, window_bounds = array<i64: 1, 4, 256>}, {transform_indices = @transform_8, window_bounds = array<i64: 1, 1, 256>}, {transform_indices = @transform_9, window_bounds = array<i64: 1, 16, 256>}]} {
    %c0 = arith.constant 0 : index
    %c0_0 = arith.constant 0 : index
    %c0_1 = arith.constant 0 : index
    %0 = vector.load %arg2[%c0, %c0_0, %c0_1] : memref<1x4x256xf32, #tpu.memory_space<vmem>>, vector<1x4x256xf32>
    %1 = vector.shape_cast %0 : vector<1x4x256xf32> to vector<4x256xf32>
    %c0_2 = arith.constant 0 : index
    %c0_3 = arith.constant 0 : index
    %2 = vector.load %arg3[%c0_2, %c0_3] : memref<16x4xf32, #tpu.memory_space<vmem>>, vector<16x4xf32>
    %cst = arith.constant dense<0.000000e+00> : vector<16x256xf32>
    %3 = tpu.matmul %2, %1, %cst {dimension_numbers = #tpu.dot_dimension_numbers<[1], [0], [0], [1], [0, 0, 1, 1], [], []>} : vector<16x4xf32>, vector<4x256xf32>, vector<16x256xf32> -> vector<16x256xf32>
    %c0_4 = arith.constant 0 : index
    %c0_5 = arith.constant 0 : index
    %4 = vector.load %arg4[%c0_4, %c0_5] : memref<16x1xf32, #tpu.memory_space<vmem>>, vector<16x1xf32>
    %5 = vector.broadcast %4 : vector<16x1xf32> to vector<16x256xf32>
    %6 = arith.addf %3, %5 : vector<16x256xf32>
    %cst_6 = arith.constant 0.000000e+00 : f32
    %7 = vector.broadcast %cst_6 : f32 to vector<16x256xf32>
    %8 = arith.maximumf %6, %7 : vector<16x256xf32>
    %c0_7 = arith.constant 0 : index
    %c0_8 = arith.constant 0 : index
    %9 = vector.load %arg5[%c0_7, %c0_8] : memref<21x16xf32, #tpu.memory_space<vmem>>, vector<21x16xf32>
    %cst_9 = arith.constant dense<0.000000e+00> : vector<21x256xf32>
    %10 = tpu.matmul %9, %8, %cst_9 {dimension_numbers = #tpu.dot_dimension_numbers<[1], [0], [0], [1], [0, 0, 1, 1], [], []>} : vector<21x16xf32>, vector<16x256xf32>, vector<21x256xf32> -> vector<21x256xf32>
    %c0_10 = arith.constant 0 : index
    %c0_11 = arith.constant 0 : index
    %11 = vector.load %arg6[%c0_10, %c0_11] : memref<21x1xf32, #tpu.memory_space<vmem>>, vector<21x1xf32>
    %12 = vector.broadcast %11 : vector<21x1xf32> to vector<21x256xf32>
    %13 = arith.addf %10, %12 : vector<21x256xf32>
    %14 = vector.extract_strided_slice %13 {offsets = [16, 0], sizes = [1, 256], strides = [1, 1]} : vector<21x256xf32> to vector<1x256xf32>
    %15 = arith.negf %14 : vector<1x256xf32>
    %16 = math.exp %15 : vector<1x256xf32>
    %cst_12 = arith.constant 1.000000e+00 : f32
    %17 = vector.broadcast %cst_12 : f32 to vector<1x256xf32>
    %18 = arith.addf %17, %16 : vector<1x256xf32>
    %19 = arith.divf %17, %18 : vector<1x256xf32>
    %c0_13 = arith.constant 0 : index
    %c0_14 = arith.constant 0 : index
    %c0_15 = arith.constant 0 : index
    %20 = vector.load %arg10[%c0_13, %c0_14, %c0_15] : memref<1x1x256xf32, #tpu.memory_space<vmem>>, vector<1x1x256xf32>
    %21 = vector.shape_cast %20 : vector<1x1x256xf32> to vector<1x256xf32>
    %22 = vector.shape_cast %19 : vector<1x256xf32> to vector<1x1x256xf32>
    tpu.vector_store %arg10[%c0_13, %c0_14, %c0_15], %22 {strides = array<i32>} : memref<1x1x256xf32, #tpu.memory_space<vmem>>, vector<1x1x256xf32>,
    %23 = vector.extract_strided_slice %13 {offsets = [17, 0], sizes = [4, 256], strides = [1, 1]} : vector<21x256xf32> to vector<4x256xf32>
    %c0_16 = arith.constant 0 : index
    %c0_17 = arith.constant 0 : index
    %c0_18 = arith.constant 0 : index
    %24 = vector.load %arg9[%c0_16, %c0_17, %c0_18] : memref<1x4x256xf32, #tpu.memory_space<vmem>>, vector<1x4x256xf32>
    %25 = vector.shape_cast %24 : vector<1x4x256xf32> to vector<4x256xf32>
    %26 = vector.shape_cast %23 : vector<4x256xf32> to vector<1x4x256xf32>
    tpu.vector_store %arg9[%c0_16, %c0_17, %c0_18], %26 {strides = array<i32>} : memref<1x4x256xf32, #tpu.memory_space<vmem>>, vector<1x4x256xf32>,
    %27 = vector.extract_strided_slice %13 {offsets = [0, 0], sizes = [16, 256], strides = [1, 1]} : vector<21x256xf32> to vector<16x256xf32>
    %cst_19 = arith.constant 0.000000e+00 : f32
    %28 = vector.broadcast %cst_19 : f32 to vector<16x256xf32>
    %29 = arith.maximumf %27, %28 : vector<16x256xf32>
    %c0_20 = arith.constant 0 : index
    %c0_21 = arith.constant 0 : index
    %30 = vector.load %arg7[%c0_20, %c0_21] : memref<16x16xf32, #tpu.memory_space<vmem>>, vector<16x16xf32>
    %cst_22 = arith.constant dense<0.000000e+00> : vector<16x256xf32>
    %31 = tpu.matmul %30, %29, %cst_22 {dimension_numbers = #tpu.dot_dimension_numbers<[1], [0], [0], [1], [0, 0, 1, 1], [], []>} : vector<16x16xf32>, vector<16x256xf32>, vector<16x256xf32> -> vector<16x256xf32>
    %c0_23 = arith.constant 0 : index
    %c0_24 = arith.constant 0 : index
    %32 = vector.load %arg8[%c0_23, %c0_24] : memref<16x1xf32, #tpu.memory_space<vmem>>, vector<16x1xf32>
    %33 = vector.broadcast %32 : vector<16x1xf32> to vector<16x256xf32>
    %34 = arith.addf %31, %33 : vector<16x256xf32>
    %cst_25 = arith.constant 0.000000e+00 : f32
    %35 = vector.broadcast %cst_25 : f32 to vector<16x256xf32>
    %36 = arith.maximumf %34, %35 : vector<16x256xf32>
    %c0_26 = arith.constant 0 : index
    %c0_27 = arith.constant 0 : index
    %c0_28 = arith.constant 0 : index
    %37 = vector.load %arg11[%c0_26, %c0_27, %c0_28] : memref<1x16x256xf32, #tpu.memory_space<vmem>>, vector<1x16x256xf32>
    %38 = vector.shape_cast %37 : vector<1x16x256xf32> to vector<16x256xf32>
    %39 = vector.shape_cast %36 : vector<16x256xf32> to vector<1x16x256xf32>
    tpu.vector_store %arg11[%c0_26, %c0_27, %c0_28], %39 {strides = array<i32>} : memref<1x16x256xf32, #tpu.memory_space<vmem>>, vector<1x16x256xf32>,
    return
  }
  func.func @transform_0(%arg0: i32, %arg1: i32) -> (i32, i32, i32) {
    %c0_i32 = arith.constant 0 : i32
    %c0_i32_0 = arith.constant 0 : i32
    return %arg0, %c0_i32, %arg1 : i32, i32, i32
  }
  func.func @transform_1(%arg0: i32, %arg1: i32) -> (i32, i32) {
    %c0_i32 = arith.constant 0 : i32
    %c0_i32_0 = arith.constant 0 : i32
    %c0_i32_1 = arith.constant 0 : i32
    return %c0_i32, %c0_i32_0 : i32, i32
  }
  func.func @transform_2(%arg0: i32, %arg1: i32) -> (i32, i32) {
    %c0_i32 = arith.constant 0 : i32
    %c0_i32_0 = arith.constant 0 : i32
    %c0_i32_1 = arith.constant 0 : i32
    return %c0_i32, %c0_i32_0 : i32, i32
  }
  func.func @transform_3(%arg0: i32, %arg1: i32) -> (i32, i32) {
    %c0_i32 = arith.constant 0 : i32
    %c0_i32_0 = arith.constant 0 : i32
    %c0_i32_1 = arith.constant 0 : i32
    return %c0_i32, %c0_i32_0 : i32, i32
  }
  func.func @transform_4(%arg0: i32, %arg1: i32) -> (i32, i32) {
    %c0_i32 = arith.constant 0 : i32
    %c0_i32_0 = arith.constant 0 : i32
    %c0_i32_1 = arith.constant 0 : i32
    return %c0_i32, %c0_i32_0 : i32, i32
  }
  func.func @transform_5(%arg0: i32, %arg1: i32) -> (i32, i32) {
    %c0_i32 = arith.constant 0 : i32
    %c0_i32_0 = arith.constant 0 : i32
    %c0_i32_1 = arith.constant 0 : i32
    return %c0_i32, %c0_i32_0 : i32, i32
  }
  func.func @transform_6(%arg0: i32, %arg1: i32) -> (i32, i32) {
    %c0_i32 = arith.constant 0 : i32
    %c0_i32_0 = arith.constant 0 : i32
    %c0_i32_1 = arith.constant 0 : i32
    return %c0_i32, %c0_i32_0 : i32, i32
  }
  func.func @transform_7(%arg0: i32, %arg1: i32) -> (i32, i32, i32) {
    %c0_i32 = arith.constant 0 : i32
    %c0_i32_0 = arith.constant 0 : i32
    return %arg0, %c0_i32, %arg1 : i32, i32, i32
  }
  func.func @transform_8(%arg0: i32, %arg1: i32) -> (i32, i32, i32) {
    %c0_i32 = arith.constant 0 : i32
    %c0_i32_0 = arith.constant 0 : i32
    return %arg0, %c0_i32, %arg1 : i32, i32, i32
  }
  func.func @transform_9(%arg0: i32, %arg1: i32) -> (i32, i32, i32) {
    %c0_i32 = arith.constant 0 : i32
    %c0_i32_0 = arith.constant 0 : i32
    return %arg0, %c0_i32, %arg1 : i32, i32, i32
  }
}

</mosaic_0001>

<llo_original>
// kernel: region_proposal_network.1
$region0: #{region_proposal_network.1}
  #allocation0 [shape = 'u32[]', space=smem, size = 0x4, offset = 0x4, fixed_abs, tag = 'smem constant byte address 0x4 - core index']
  #allocation1 [shape = 'u32[72,128]{1,0:T(1,128)}', space=vmem, size = 0x9000, scoped, tag = 'internal scratch']
  %s0 = inlined_call_operand.vmem [shape: f32[2,4,256], index: 0, kind: input, shape index: {}]
  %s1 = inlined_call_operand.vmem [shape: f32[16,4], index: 1, kind: input, shape index: {}]
  %s2 = inlined_call_operand.vmem [shape: f32[16,1], index: 2, kind: input, shape index: {}]
  %s3 = inlined_call_operand.vmem [shape: f32[21,16], index: 3, kind: input, shape index: {}]
  %s4 = inlined_call_operand.vmem [shape: f32[21,1], index: 4, kind: input, shape index: {}]
  %s5 = inlined_call_operand.vmem [shape: f32[16,16], index: 5, kind: input, shape index: {}]
  %s6 = inlined_call_operand.vmem [shape: f32[16,1], index: 6, kind: input, shape index: {}]
  %s7 = inlined_call_operand.vmem [shape: f32[2,4,256], index: 7, kind: output, shape index: {0}]
  %s8 = inlined_call_operand.vmem [shape: f32[2,1,256], index: 8, kind: output, shape index: {1}]
  %s9 = inlined_call_operand.vmem [shape: f32[2,16,256], index: 9, kind: output, shape index: {2}]
  %10 = xla_tuple %s7, %s8, %s9
  %s11 = sld [smem:[#allocation0]]
  $region77: #{region_proposal_network.1} parent=0
    _
  %s13 = ssub.s32 1, %s11
  %s14 = scalar_select 0, %s13, %s11
  loop: start=0, step=1, limit=4
  $region2: #{region_proposal_network.1} parent=0 // loop_pre_header
    _
  $region3: #{region_proposal_network.1} parent=0 // loop_header
    %s16 = sphi 0, %s20
    %p17 = scmp.ge.s32.totalorder %s16, 4
    %s23 = sphi 0, %s35
    %s24 = sphi 0, %s31
    %s25 = sphi 0, %s23
    %s26 = sphi 0, %s24
    %s27 = sphi 0, %s25
    %s28 = sphi 0, %s26
    %s40 = sphi 0, %s42
    %s43 = sphi 0, %s40
    %s44 = sphi 0, %s43
    %s60 = sphi 0, %s44
    %s64 = sphi 0, %s64
    %s66 = sphi 0, %s64
    %s67 = sphi 0, %s66
    %s81 = sphi 0, %s67
    %s85 = sphi 0, %s85
    %s87 = sphi 0, %s85
    %s88 = sphi 0, %s87
    %s102 = sphi 0, %s88
    %s106 = sphi 0, %s106
    %s108 = sphi 0, %s106
    %s109 = sphi 0, %s108
    %s123 = sphi 0, %s109
    %s127 = sphi 0, %s127
    %s129 = sphi 0, %s127
    %s130 = sphi 0, %s129
    %s144 = sphi 0, %s130
    %s148 = sphi 0, %s148
    %s150 = sphi 0, %s148
    %s151 = sphi 0, %s150
    %s165 = sphi 0, %s151
    %s169 = sphi 0, %s169
    %s171 = sphi 0, %s169
    %s172 = sphi 0, %s171
    %s186 = sphi 0, %s172
    %s194 = sphi 0, %s196
    %s197 = sphi 0, %s194
    %s198 = sphi 0, %s197
    %s214 = sphi 0, %s198
    %s222 = sphi 0, %s224
    %s225 = sphi 0, %s222
    %s226 = sphi 0, %s225
    %s242 = sphi 0, %s226
    %s250 = sphi 0, %s252
    %s253 = sphi 0, %s250
    %s254 = sphi 0, %s253
    %s270 = sphi 0, %s254
  $region4: #{region_proposal_network.1} parent=0 // loop_header_branch
    %19 = sbr.rel (%p17) target = $region8
  $region5: #{region_proposal_network.1} parent=0 // loop_body
    %s21 = ssub.s32 %s16, 1
    %s22 = ssub.s32 %s16, 2
    %s29 = sadd.s32 1, %s24
    %p30 = scmp.ge.s32.totalorder %s29, 1
    %s31 = scalar_select %p30, 0, %s29
    %s32 = sadd.s32 1, %s23
    %s33 = scalar_select %p30, %s32, %s23
    %p34 = scmp.ge.s32.totalorder %s33, 2
    %s35 = scalar_select %p34, 0, %s33
    %s36 = ssub.s32 %s23, %s35
    %s37 = ssub.s32 %s24, %s31
    %s38 = sor.u32 %s36, %s37
    %p39 = scmp.eq.s32.totalorder %s38, 0
    %s41 = sadd.s32 %s40, 1
    %s42 = scalar_select %p39, %s40, %s41
    %p45 = pneg %p39
    %p46 = scmp.eq.s32.totalorder %s16, 1
    %p47 = por %p45, %p46
    %p48 = scmp.ne.s32.totalorder %s40, %s43
    %p49 = scmp.eq.s32.totalorder %s16, 0
    %p50 = por %p48, %p49
    %p51 = scmp.ne.s32.totalorder %s40, %s43
    %p52 = scmp.eq.s32.totalorder %s21, 1
    %p53 = por %p51, %p52
    %p54 = scmp.ne.s32.totalorder %s43, %s44
    %p55 = scmp.eq.s32.totalorder %s21, 0
    %p56 = por %p54, %p55
    %p57 = scmp.ne.s32.totalorder %s43, %s44
    %p58 = scmp.eq.s32.totalorder %s22, 1
    %p59 = por %p57, %p58
    %p61 = scmp.ne.s32.totalorder %s44, %s60
    %p62 = scmp.eq.s32.totalorder %s22, 0
    %p63 = por %p61, %p62
    %s65 = sadd.s32 %s64, 1
    %p68 = scmp.eq.s32.totalorder %s16, 1
    %p69 = scmp.ne.s32.totalorder %s64, %s66
    %p70 = scmp.eq.s32.totalorder %s16, 0
    %p71 = por %p69, %p70
    %p72 = scmp.ne.s32.totalorder %s64, %s66
    %p73 = scmp.eq.s32.totalorder %s21, 1
    %p74 = por %p72, %p73
    %p75 = scmp.ne.s32.totalorder %s66, %s67
    %p76 = scmp.eq.s32.totalorder %s21, 0
    %p77 = por %p75, %p76
    %p78 = scmp.ne.s32.totalorder %s66, %s67
    %p79 = scmp.eq.s32.totalorder %s22, 1
    %p80 = por %p78, %p79
    %p82 = scmp.ne.s32.totalorder %s67, %s81
    %p83 = scmp.eq.s32.totalorder %s22, 0
    %p84 = por %p82, %p83
    %s86 = sadd.s32 %s85, 1
    %p89 = scmp.eq.s32.totalorder %s16, 1
    %p90 = scmp.ne.s32.totalorder %s85, %s87
    %p91 = scmp.eq.s32.totalorder %s16, 0
    %p92 = por %p90, %p91
    %p93 = scmp.ne.s32.totalorder %s85, %s87
    %p94 = scmp.eq.s32.totalorder %s21, 1
    %p95 = por %p93, %p94
    %p96 = scmp.ne.s32.totalorder %s87, %s88
    %p97 = scmp.eq.s32.totalorder %s21, 0
    %p98 = por %p96, %p97
    %p99 = scmp.ne.s32.totalorder %s87, %s88
    %p100 = scmp.eq.s32.totalorder %s22, 1
    %p101 = por %p99, %p100
    %p103 = scmp.ne.s32.totalorder %s88, %s102
    %p104 = scmp.eq.s32.totalorder %s22, 0
    %p105 = por %p103, %p104
    %s107 = sadd.s32 %s106, 1
    %p110 = scmp.eq.s32.totalorder %s16, 1
    %p111 = scmp.ne.s32.totalorder %s106, %s108
    %p112 = scmp.eq.s32.totalorder %s16, 0
    %p113 = por %p111, %p112
    %p114 = scmp.ne.s32.totalorder %s106, %s108
    %p115 = scmp.eq.s32.totalorder %s21, 1
    %p116 = por %p114, %p115
    %p117 = scmp.ne.s32.totalorder %s108, %s109
    %p118 = scmp.eq.s32.totalorder %s21, 0
    %p119 = por %p117, %p118
    %p120 = scmp.ne.s32.totalorder %s108, %s109
    %p121 = scmp.eq.s32.totalorder %s22, 1
    %p122 = por %p120, %p121
    %p124 = scmp.ne.s32.totalorder %s109, %s123
    %p125 = scmp.eq.s32.totalorder %s22, 0
    %p126 = por %p124, %p125
    %s128 = sadd.s32 %s127, 1
    %p131 = scmp.eq.s32.totalorder %s16, 1
    %p132 = scmp.ne.s32.totalorder %s127, %s129
    %p133 = scmp.eq.s32.totalorder %s16, 0
    %p134 = por %p132, %p133
    %p135 = scmp.ne.s32.totalorder %s127, %s129
    %p136 = scmp.eq.s32.totalorder %s21, 1
    %p137 = por %p135, %p136
    %p138 = scmp.ne.s32.totalorder %s129, %s130
    %p139 = scmp.eq.s32.totalorder %s21, 0
    %p140 = por %p138, %p139
    %p141 = scmp.ne.s32.totalorder %s129, %s130
    %p142 = scmp.eq.s32.totalorder %s22, 1
    %p143 = por %p141, %p142
    %p145 = scmp.ne.s32.totalorder %s130, %s144
    %p146 = scmp.eq.s32.totalorder %s22, 0
    %p147 = por %p145, %p146
    %s149 = sadd.s32 %s148, 1
    %p152 = scmp.eq.s32.totalorder %s16, 1
    %p153 = scmp.ne.s32.totalorder %s148, %s150
    %p154 = scmp.eq.s32.totalorder %s16, 0
    %p155 = por %p153, %p154
    %p156 = scmp.ne.s32.totalorder %s148, %s150
    %p157 = scmp.eq.s32.totalorder %s21, 1
    %p158 = por %p156, %p157
    %p159 = scmp.ne.s32.totalorder %s150, %s151
    %p160 = scmp.eq.s32.totalorder %s21, 0
    %p161 = por %p159, %p160
    %p162 = scmp.ne.s32.totalorder %s150, %s151
    %p163 = scmp.eq.s32.totalorder %s22, 1
    %p164 = por %p162, %p163
    %p166 = scmp.ne.s32.totalorder %s151, %s165
    %p167 = scmp.eq.s32.totalorder %s22, 0
    %p168 = por %p166, %p167
    %s170 = sadd.s32 %s169, 1
    %p173 = scmp.eq.s32.totalorder %s16, 1
    %p174 = scmp.ne.s32.totalorder %s169, %s171
    %p175 = scmp.eq.s32.totalorder %s16, 0
    %p176 = por %p174, %p175
    %p177 = scmp.ne.s32.totalorder %s169, %s171
    %p178 = scmp.eq.s32.totalorder %s21, 1
    %p179 = por %p177, %p178
    %p180 = scmp.ne.s32.totalorder %s171, %s172
    %p181 = scmp.eq.s32.totalorder %s21, 0
    %p182 = por %p180, %p181
    %p183 = scmp.ne.s32.totalorder %s171, %s172
    %p184 = scmp.eq.s32.totalorder %s22, 1
    %p185 = por %p183, %p184
    %p187 = scmp.ne.s32.totalorder %s172, %s186
    %p188 = scmp.eq.s32.totalorder %s22, 0
    %p189 = por %p187, %p188
    %s190 = ssub.s32 %s23, %s35
    %s191 = ssub.s32 %s24, %s31
    %s192 = sor.u32 %s190, %s191
    %p193 = scmp.eq.s32.totalorder %s192, 0
    %s195 = sadd.s32 %s194, 1
    %s196 = scalar_select %p193, %s194, %s195
    %p199 = pneg %p193
    %p200 = scmp.eq.s32.totalorder %s16, 1
    %p201 = por %p199, %p200
    %p202 = scmp.ne.s32.totalorder %s194, %s197
    %p203 = scmp.eq.s32.totalorder %s16, 0
    %p204 = por %p202, %p203
    %p205 = scmp.ne.s32.totalorder %s194, %s197
    %p206 = scmp.eq.s32.totalorder %s21, 1
    %p207 = por %p205, %p206
    %p208 = scmp.ne.s32.totalorder %s197, %s198
    %p209 = scmp.eq.s32.totalorder %s21, 0
    %p210 = por %p208, %p209
    %p211 = scmp.ne.s32.totalorder %s197, %s198
    %p212 = scmp.eq.s32.totalorder %s22, 1
    %p213 = por %p211, %p212
    %p215 = scmp.ne.s32.totalorder %s198, %s214
    %p216 = scmp.eq.s32.totalorder %s22, 0
    %p217 = por %p215, %p216
    %s218 = ssub.s32 %s23, %s35
    %s219 = ssub.s32 %s24, %s31
    %s220 = sor.u32 %s218, %s219
    %p221 = scmp.eq.s32.totalorder %s220, 0
    %s223 = sadd.s32 %s222, 1
    %s224 = scalar_select %p221, %s222, %s223
    %p227 = pneg %p221
    %p228 = scmp.eq.s32.totalorder %s16, 1
    %p229 = por %p227, %p228
    %p230 = scmp.ne.s32.totalorder %s222, %s225
    %p231 = scmp.eq.s32.totalorder %s16, 0
    %p232 = por %p230, %p231
    %p233 = scmp.ne.s32.totalorder %s222, %s225
    %p234 = scmp.eq.s32.totalorder %s21, 1
    %p235 = por %p233, %p234
    %p236 = scmp.ne.s32.totalorder %s225, %s226
    %p237 = scmp.eq.s32.totalorder %s21, 0
    %p238 = por %p236, %p237
    %p239 = scmp.ne.s32.totalorder %s225, %s226
    %p240 = scmp.eq.s32.totalorder %s22, 1
    %p241 = por %p239, %p240
    %p243 = scmp.ne.s32.totalorder %s226, %s242
    %p244 = scmp.eq.s32.totalorder %s22, 0
    %p245 = por %p243, %p244
    %s246 = ssub.s32 %s23, %s35
    %s247 = ssub.s32 %s24, %s31
    %s248 = sor.u32 %s246, %s247
    %p249 = scmp.eq.s32.totalorder %s248, 0
    %s251 = sadd.s32 %s250, 1
    %s252 = scalar_select %p249, %s250, %s251
    %p255 = pneg %p249
    %p256 = scmp.eq.s32.totalorder %s16, 1
    %p257 = por %p255, %p256
    %p258 = scmp.ne.s32.totalorder %s250, %s253
    %p259 = scmp.eq.s32.totalorder %s16, 0
    %p260 = por %p258, %p259
    %p261 = scmp.ne.s32.totalorder %s250, %s253
    %p262 = scmp.eq.s32.totalorder %s21, 1
    %p263 = por %p261, %p262
    %p264 = scmp.ne.s32.totalorder %s253, %s254
    %p265 = scmp.eq.s32.totalorder %s21, 0
    %p266 = por %p264, %p265
    %p267 = scmp.ne.s32.totalorder %s253, %s254
    %p268 = scmp.eq.s32.totalorder %s22, 1
    %p269 = por %p267, %p268
    %p271 = scmp.ne.s32.totalorder %s254, %s270
    %p272 = scmp.eq.s32.totalorder %s22, 0
    %p273 = por %p271, %p272
    %p274 = scmp.le.s32.totalorder 1, %s16
    %p275 = scmp.lt.s32.totalorder %s16, 3
    %p276 = pnand %p274, %p275
    %p277 = pneg %p276
    // Predicated region
    $region9: #{region_proposal_network.1} parent=5 // pred_check
      _
    $region10: #{region_proposal_network.1} parent=5 // pred_check_branch
      %279 = sbr.rel (%p276) target = $region12
    $region11: #{region_proposal_network.1} parent=5 // pred_region
      %s280 = ssub.s32 %s16, 1
      // Predicated region
      $region13: #{region_proposal_network.1} parent=11 // pred_check
        %p281 = pneg %p77
      $region14: #{region_proposal_network.1} parent=11 // pred_check_branch
        %283 = sbr.rel (%p281) target = $region16
      $region15: #{region_proposal_network.1} parent=11 // pred_region
        _
      $region16: #{region_proposal_network.1} parent=11 // pred_fallthru
        _
      // Predicated region
      $region17: #{region_proposal_network.1} parent=11 // pred_check
        %p284 = pneg %p98
      $region18: #{region_proposal_network.1} parent=11 // pred_check_branch
        %286 = sbr.rel (%p284) target = $region20
      $region19: #{region_proposal_network.1} parent=11 // pred_region
        _
      $region20: #{region_proposal_network.1} parent=11 // pred_fallthru
        _
      // Predicated region
      $region21: #{region_proposal_network.1} parent=11 // pred_check
        %p287 = pneg %p119
      $region22: #{region_proposal_network.1} parent=11 // pred_check_branch
        %289 = sbr.rel (%p287) target = $region24
      $region23: #{region_proposal_network.1} parent=11 // pred_region
        _
      $region24: #{region_proposal_network.1} parent=11 // pred_fallthru
        _
      // Predicated region
      $region25: #{region_proposal_network.1} parent=11 // pred_check
        %p290 = pneg %p140
      $region26: #{region_proposal_network.1} parent=11 // pred_check_branch
        %292 = sbr.rel (%p290) target = $region28
      $region27: #{region_proposal_network.1} parent=11 // pred_region
        _
      $region28: #{region_proposal_network.1} parent=11 // pred_fallthru
        _
      // Predicated region
      $region29: #{region_proposal_network.1} parent=11 // pred_check
        %p293 = pneg %p161
      $region30: #{region_proposal_network.1} parent=11 // pred_check_branch
        %295 = sbr.rel (%p293) target = $region32
      $region31: #{region_proposal_network.1} parent=11 // pred_region
        _
      $region32: #{region_proposal_network.1} parent=11 // pred_fallthru
        _
      // Predicated region
      $region33: #{region_proposal_network.1} parent=11 // pred_check
        %p296 = pneg %p182
      $region34: #{region_proposal_network.1} parent=11 // pred_check_branch
        %298 = sbr.rel (%p296) target = $region36
      $region35: #{region_proposal_network.1} parent=11 // pred_region
        _
      $region36: #{region_proposal_network.1} parent=11 // pred_fallthru
        _
    $region12: #{region_proposal_network.1} parent=5 // pred_fallthru
      _
    %p299 = scmp.lt.s32.totalorder %s16, 2
    // Predicated region
    $region37: #{region_proposal_network.1} parent=5 // pred_check
      %p300 = pneg %p299
    $region38: #{region_proposal_network.1} parent=5 // pred_check_branch
      %302 = sbr.rel (%p300) target = $region40
    $region39: #{region_proposal_network.1} parent=5 // pred_region
      // Predicated region
      $region41: #{region_proposal_network.1} parent=39 // pred_check
        %p303 = pneg %p50
      $region42: #{region_proposal_network.1} parent=39 // pred_check_branch
        %305 = sbr.rel (%p303) target = $region44
      $region43: #{region_proposal_network.1} parent=39 // pred_region
        %s306 = smul.u32 2, %s24
        %p307 = scmp.lt.s32.totalorder %s23, 1
        %s308 = scalar_select %p307, %s23, 1
        %p309 = scmp.lt.s32.totalorder %s306, 1
        %s310 = scalar_select %p309, %s306, 1
        %s311 = smul.addr %s308, 2
        %s312 = sadd.s32 %s310, %s311
        %s313 = smul.addr %s312, 4
        %s314 = scalar_lea.vmem %s0, %s313
        %s315 = smul.u32 2, %s24
      $region44: #{region_proposal_network.1} parent=39 // pred_fallthru
        _
    $region40: #{region_proposal_network.1} parent=5 // pred_fallthru
      _
    %p316 = scmp.le.s32.totalorder 1, %s16
    %p317 = scmp.lt.s32.totalorder %s16, 3
    %p318 = pnand %p316, %p317
    %p319 = pneg %p318
    // Predicated region
    $region45: #{region_proposal_network.1} parent=5 // pred_check
      _
    $region46: #{region_proposal_network.1} parent=5 // pred_check_branch
      %321 = sbr.rel (%p318) target = $region48
    $region47: #{region_proposal_network.1} parent=5 // pred_region
      %s322 = ssub.s32 %s16, 1
      %s323 = smul.u32 2, %s26
      %p324 = scmp.lt.s32.totalorder %s25, 1
      %s325 = scalar_select %p324, %s25, 1
      %p326 = scmp.lt.s32.totalorder %s323, 1
      %s327 = scalar_select %p326, %s323, 1
      %s328 = smul.addr %s325, 2
      %s329 = sadd.s32 %s327, %s328
      %s330 = smul.addr %s329, 4
      %s331 = scalar_lea.vmem %s0, %s330
      %p332 = pneg %p56
      %p333 = pneg %p53
      %p334 = pneg %p77
      %p335 = pneg %p74
      %p336 = pneg %p98
      %p337 = pneg %p95
      %p338 = pneg %p119
      %p339 = pneg %p116
      %p340 = pneg %p140
      %p341 = pneg %p137
      %p342 = pneg %p161
      %p343 = pneg %p158
      %p344 = pneg %p182
      %p345 = pneg %p179
      %p346 = pneg %p210
      %p347 = pneg %p207
      %s348 = smul.u32 2, %s26
      %p349 = scmp.lt.s32.totalorder %s25, 1
      %s350 = scalar_select %p349, %s25, 1
      %p351 = scmp.lt.s32.totalorder %s348, 1
      %s352 = scalar_select %p351, %s348, 1
      %s353 = smul.addr %s350, 2
      %s354 = sadd.s32 %s352, %s353
      %s355 = smul.addr %s354, 4
      %s356 = scalar_lea.vmem %s7, %s355
      %p357 = pneg %p238
      %p358 = pneg %p235
      %s359 = smul.u32 2, %s26
      %p360 = scmp.lt.s32.totalorder %s25, 1
      %s361 = scalar_select %p360, %s25, 1
      %p362 = scmp.lt.s32.totalorder %s359, 1
      %s363 = scalar_select %p362, %s359, 1
      %s364 = smul.addr %s361, 2
      %s365 = sadd.s32 %s363, %s364
      %s366 = scalar_lea.vmem %s8, %s365
      %p367 = pneg %p266
      %p368 = pneg %p263
      %s369 = smul.u32 2, %s26
      %p370 = scmp.lt.s32.totalorder %s25, 1
      %s371 = scalar_select %p370, %s25, 1
      %p372 = scmp.lt.s32.totalorder %s369, 1
      %s373 = scalar_select %p372, %s369, 1
      %s374 = smul.addr %s371, 4
      %s375 = sadd.s32 %s373, %s374
      %s376 = smul.addr %s375, 8
      %s377 = scalar_lea.vmem %s9, %s376
      %s378 = smul.u32 2, %s26
      %p379 = scmp.lt.s32.totalorder %s25, 1
      %s380 = scalar_select %p379, %s25, 1
      %p381 = scmp.lt.s32.totalorder %s378, 1
      %s382 = scalar_select %p381, %s378, 1
      %s383 = smul.addr %s380, 2
      %s384 = sadd.s32 %s382, %s383
      %s385 = smul.addr %s384, 4
      %s386 = scalar_lea.vmem %s0, %s385
      %s387 = smul.u32 2, %s26
      %s388 = smul.u32 2, %s26
      %p389 = scmp.lt.s32.totalorder %s25, 1
      %s390 = scalar_select %p389, %s25, 1
      %p391 = scmp.lt.s32.totalorder %s388, 1
      %s392 = scalar_select %p391, %s388, 1
      %s393 = smul.addr %s390, 2
      %s394 = sadd.s32 %s392, %s393
      %s395 = smul.addr %s394, 4
      %s396 = scalar_lea.vmem %s7, %s395
      %s397 = smul.u32 2, %s26
      %s398 = smul.u32 2, %s26
      %p399 = scmp.lt.s32.totalorder %s25, 1
      %s400 = scalar_select %p399, %s25, 1
      %p401 = scmp.lt.s32.totalorder %s398, 1
      %s402 = scalar_select %p401, %s398, 1
      %s403 = smul.addr %s400, 2
      %s404 = sadd.s32 %s402, %s403
      %s405 = scalar_lea.vmem %s8, %s404
      %s406 = smul.u32 2, %s26
      %s407 = smul.u32 2, %s26
      %p408 = scmp.lt.s32.totalorder %s25, 1
      %s409 = scalar_select %p408, %s25, 1
      %p410 = scmp.lt.s32.totalorder %s407, 1
      %s411 = scalar_select %p410, %s407, 1
      %s412 = smul.addr %s409, 4
      %s413 = sadd.s32 %s411, %s412
      %s414 = smul.addr %s413, 8
      %s415 = scalar_lea.vmem %s9, %s414
      %s416 = smul.u32 2, %s26
      %v417 = vld [vmem:[%s386] sm:$0xff]
      %v418 = vld [vmem:[%s1] sm:$0xff]
      %v419 = vld [vmem:[%s1 + $0x8] sm:$0xff]
      %v420 = vld [vmem:[%s2] sm:$0xff]
      %v421 = vld [vmem:[%s2 + $0x8] sm:$0xff]
      %423 = vset.pattern.permute.xlu0 0
      %424 = vperm.xlu0 %423, %v420
      %v425 = vpop.permute.xlu0 %424
      %428 = vset.pattern.permute.xlu0 0
      %429 = vperm.xlu0 %428, %v421
      %v430 = vpop.permute.xlu0 %429
      %433 = vst [vmem:[#allocation1] ss:$2 sm:$0xff] %v417
      %v434 = vld.sshfl [vmem:[#allocation1] sm:$0xff pattern:$0x75316420]
      %v435 = vld.sshfl [vmem:[#allocation1 + $0x8] sm:$0xff pattern:$0x75316420]
      %vm436 = vcmask 31744
      %v438 = vsel %vm436, %v418, 0
      %v441 = vsel %vm436, %v419, 0
      %vm443 = vcmask 1043456
      %v444 = vsel %vm443, %v434, 0
      %v446 = vsel %vm443, %v435, 0
      %448 = vmatpush.msra.mxu0 0.0
      %449 = vmatpush.msra.mxu0 0.0
      %450 = vmatpush.msra.mxu0 0.0
      %451 = vmatpush.msra.mxu0 0.0
      %452 = vmatpush.msra.mxu0 0.0
      %453 = vmatpush.msra.mxu0 0.0
      %454 = vmatpush.msra.mxu0 0.0
      %455 = vmatpush.msra.mxu0 0.0
      %456 = vmatpush.msra.mxu0 0.0
      %457 = vmatpush.msra.mxu0 0.0
      %458 = vmatpush.msra.mxu0 0.0
      %459 = vmatpush.msra.mxu0 0.0
      %460 = vmatpush.msra.mxu0 0.0
      %461 = vmatpush.msra.mxu0 0.0
      %462 = vmatpush.msra.mxu0 0.0
      %463 = vmatpush.msra.mxu0 %v444
      %464 = vmatmul.f32.gmra.mxu0 %v438
      %v465 = vpop.f32.mrf.mxu0
      %v466 = vadd.f32 %v425, %v465
      %467 = vmatmul.f32.gmra.mxu0 %v441
      %v468 = vpop.f32.mrf.mxu0
      %v469 = vadd.f32 %v430, %v468
      %470 = vdwg.mxu0
      %471 = vmatpush.msra.mxu0 0.0
      %472 = vmatpush.msra.mxu0 0.0
      %473 = vmatpush.msra.mxu0 0.0
      %474 = vmatpush.msra.mxu0 0.0
      %475 = vmatpush.msra.mxu0 0.0
      %476 = vmatpush.msra.mxu0 0.0
      %477 = vmatpush.msra.mxu0 0.0
      %478 = vmatpush.msra.mxu0 0.0
      %479 = vmatpush.msra.mxu0 0.0
      %480 = vmatpush.msra.mxu0 0.0
      %481 = vmatpush.msra.mxu0 0.0
      %482 = vmatpush.msra.mxu0 0.0
      %483 = vmatpush.msra.mxu0 0.0
      %484 = vmatpush.msra.mxu0 0.0
      %485 = vmatpush.msra.mxu0 0.0
      %486 = vmatpush.msra.mxu0 %v446
      %487 = vmatmul.f32.gmra.mxu0 %v438
      %v488 = vpop.f32.mrf.mxu0
      %v489 = vadd.f32 %v425, %v488
      %490 = vmatmul.f32.gmra.mxu0 %v441
      %v491 = vpop.f32.mrf.mxu0
      %v492 = vadd.f32 %v430, %v491
      %493 = vdwg.mxu0
      %v494 = vmax.f32 %v466, 0.0
      %v495 = vmax.f32 %v489, 0.0
      %v496 = vmax.f32 %v469, 0.0
      %v497 = vmax.f32 %v492, 0.0
      %v498 = vld [vmem:[%s3] sm:$0xff]
      %v499 = vld [vmem:[%s3 + $0x8] sm:$0xff]
      %v500 = vld [vmem:[%s3 + $0x10] sm:$0x1f]
      %v501 = vld [vmem:[%s4] sm:$0xff]
      %v502 = vld [vmem:[%s4 + $0x8] sm:$0xff]
      %v503 = vld [vmem:[%s4 + $0x10] sm:$0x1f]
      %505 = vset.pattern.permute.xlu0 0
      %506 = vperm.xlu0 %505, %v501
      %v507 = vpop.permute.xlu0 %506
      %510 = vset.pattern.permute.xlu0 0
      %511 = vperm.xlu0 %510, %v502
      %v512 = vpop.permute.xlu0 %511
      %515 = vset.pattern.permute.xlu0 0
      %516 = vperm.xlu0 %515, %v503
      %v517 = vpop.permute.xlu0 %516
      %vm519 = vcmask 130048
      %v521 = vsel %vm519, %v498, 0
      %v524 = vsel %vm519, %v499, 0
      %v527 = vsel %vm519, %v500, 0
      %529 = vmatpush.msra.mxu0 0.0
      %530 = vmatpush.msra.mxu0 0.0
      %531 = vmatpush.msra.mxu0 0.0
      %532 = vmatpush.msra.mxu0 0.0
      %533 = vmatpush.msra.mxu0 0.0
      %534 = vmatpush.msra.mxu0 0.0
      %535 = vmatpush.msra.mxu0 0.0
      %536 = vmatpush.msra.mxu0 0.0
      %537 = vmatpush.msra.mxu0 0.0
      %538 = vmatpush.msra.mxu0 0.0
      %539 = vmatpush.msra.mxu0 0.0
      %540 = vmatpush.msra.mxu0 0.0
      %541 = vmatpush.msra.mxu0 0.0
      %542 = vmatpush.msra.mxu0 0.0
      %543 = vmatpush.msra.mxu0 %v496
      %544 = vmatpush.msra.mxu0 %v494
      %545 = vmatmul.f32.gmra.mxu0 %v521
      %v546 = vpop.f32.mrf.mxu0
      %v547 = vadd.f32 %v507, %v546
      %548 = vmatmul.f32.gmra.mxu0 %v524
      %v549 = vpop.f32.mrf.mxu0
      %v550 = vadd.f32 %v512, %v549
      %551 = vmatmul.f32.gmra.mxu0 %v527
      %v552 = vpop.f32.mrf.mxu0
      %v553 = vadd.f32 %v517, %v552
      %554 = vdwg.mxu0
      %555 = vmatpush.msra.mxu0 0.0
      %556 = vmatpush.msra.mxu0 0.0
      %557 = vmatpush.msra.mxu0 0.0
      %558 = vmatpush.msra.mxu0 0.0
      %559 = vmatpush.msra.mxu0 0.0
      %560 = vmatpush.msra.mxu0 0.0
      %561 = vmatpush.msra.mxu0 0.0
      %562 = vmatpush.msra.mxu0 0.0
      %563 = vmatpush.msra.mxu0 0.0
      %564 = vmatpush.msra.mxu0 0.0
      %565 = vmatpush.msra.mxu0 0.0
      %566 = vmatpush.msra.mxu0 0.0
      %567 = vmatpush.msra.mxu0 0.0
      %568 = vmatpush.msra.mxu0 0.0
      %569 = vmatpush.msra.mxu0 %v497
      %570 = vmatpush.msra.mxu0 %v495
      %571 = vmatmul.f32.gmra.mxu0 %v521
      %v572 = vpop.f32.mrf.mxu0
      %v573 = vadd.f32 %v507, %v572
      %574 = vmatmul.f32.gmra.mxu0 %v524
      %v575 = vpop.f32.mrf.mxu0
      %v576 = vadd.f32 %v512, %v575
      %577 = vmatmul.f32.gmra.mxu0 %v527
      %v578 = vpop.f32.mrf.mxu0
      %v579 = vadd.f32 %v517, %v578
      %580 = vdwg.mxu0
      %v581 = vxor.u32 %v553, 2147483648
      %v582 = vxor.u32 %v579, 2147483648
      %v583 = vmul.f32 %v581, 1.442695
      %v584 = vpow.pop %v583
      %v585 = vmul.f32 %v582, 1.442695
      %v586 = vpow.pop %v585
      %v587 = vadd.f32 %v584, 1.0
      %v588 = vadd.f32 %v586, 1.0
      %v589 = vrcp.pop %v587
      %v590 = vmul.f32 %v587, %v589
      %v591 = vsub.f32 1.0, %v590
      %v592 = vmul.f32 %v589, %v591
      %v593 = vadd.f32 %v589, %v592
      %vm594 = vweird.f32 %v587
      %vm595 = vweird.f32 %v589
      %vm596 = vmor %vm594, %vm595
      %v597 = vsel %vm596, %v589, %v593
      %v598 = vand.u32 2147483647, %v587
      %vm599 = vcmp.eq.f32.partialorder %v598, 8.507059e+37
      %v600 = vand.u32 %v587, 2147483648
      %v601 = vor.u32 1.1754944e-38, %v600
      %v602 = vsel %vm599, %v601, %v597
      %v603 = vmul.f32 1.0, %v602
      %v604 = vrcp.pop %v588
      %v605 = vmul.f32 %v588, %v604
      %v606 = vsub.f32 1.0, %v605
      %v607 = vmul.f32 %v604, %v606
      %v608 = vadd.f32 %v604, %v607
      %vm609 = vweird.f32 %v588
      %vm610 = vweird.f32 %v604
      %vm611 = vmor %vm609, %vm610
      %v612 = vsel %vm611, %v604, %v608
      %v613 = vand.u32 2147483647, %v588
      %vm614 = vcmp.eq.f32.partialorder %v613, 8.507059e+37
      %v615 = vand.u32 %v588, 2147483648
      %v616 = vor.u32 1.1754944e-38, %v615
      %v617 = vsel %vm614, %v616, %v612
      %v618 = vmul.f32 1.0, %v617
      %v621 = vrot.slane %v618, 7
      %vm622 = vcmask 1040384
      %v623 = vsel %vm622, %v603, %v621
      %v625 = vlaneseq
      %vm626 = vcmp.ge.s32.totalorder %v625, 0
      %vm627 = vcmp.lt.s32.totalorder %v625, 256
      %vm628 = vmand %vm626, %vm627
      %629 = vst.msk [vmem:[%s405] sm:$0x3] %vm628, %v623
      %v632 = vrot.slane %v579, 4
      %v633 = vsel %vm443, %v553, %v632
      %v634 = vsel %vm443, %v632, %v553
      %v635 = vrot.slane %v634, 4
      %vm636 = vcmask 1042432
      %vm637 = vcmask 1046532
      %vm638 = vmor %vm636, %vm637
      %v639 = vrot.slane %v633, 5
      %v640 = vrot.slane %v639, 4
      %v641 = vrot.slane %v635, 5
      %v642 = vsel %vm638, %v640, %v641
      %644 = vst [vmem:[%s396] sm:$0xff] %v642
      %v645 = vmax.f32 %v547, 0.0
      %v646 = vmax.f32 %v573, 0.0
      %v647 = vmax.f32 %v550, 0.0
      %v648 = vmax.f32 %v576, 0.0
      %v649 = vld [vmem:[%s5] sm:$0xff]
      %v650 = vld [vmem:[%s5 + $0x8] sm:$0xff]
      %v651 = vld [vmem:[%s6] sm:$0xff]
      %v652 = vld [vmem:[%s6 + $0x8] sm:$0xff]
      %654 = vset.pattern.permute.xlu0 0
      %655 = vperm.xlu0 %654, %v651
      %v656 = vpop.permute.xlu0 %655
      %659 = vset.pattern.permute.xlu0 0
      %660 = vperm.xlu0 %659, %v652
      %v661 = vpop.permute.xlu0 %660
      %v664 = vsel %vm519, %v649, 0
      %v667 = vsel %vm519, %v650, 0
      %669 = vmatpush.msra.mxu0 0.0
      %670 = vmatpush.msra.mxu0 0.0
      %671 = vmatpush.msra.mxu0 0.0
      %672 = vmatpush.msra.mxu0 0.0
      %673 = vmatpush.msra.mxu0 0.0
      %674 = vmatpush.msra.mxu0 0.0
      %675 = vmatpush.msra.mxu0 0.0
      %676 = vmatpush.msra.mxu0 0.0
      %677 = vmatpush.msra.mxu0 0.0
      %678 = vmatpush.msra.mxu0 0.0
      %679 = vmatpush.msra.mxu0 0.0
      %680 = vmatpush.msra.mxu0 0.0
      %681 = vmatpush.msra.mxu0 0.0
      %682 = vmatpush.msra.mxu0 0.0
      %683 = vmatpush.msra.mxu0 %v647
      %684 = vmatpush.msra.mxu0 %v645
      %685 = vmatmul.f32.gmra.mxu0 %v664
      %v686 = vpop.f32.mrf.mxu0
      %v687 = vadd.f32 %v656, %v686
      %688 = vmatmul.f32.gmra.mxu0 %v667
      %v689 = vpop.f32.mrf.mxu0
      %v690 = vadd.f32 %v661, %v689
      %691 = vdwg.mxu0
      %692 = vmatpush.msra.mxu0 0.0
      %693 = vmatpush.msra.mxu0 0.0
      %694 = vmatpush.msra.mxu0 0.0
      %695 = vmatpush.msra.mxu0 0.0
      %696 = vmatpush.msra.mxu0 0.0
      %697 = vmatpush.msra.mxu0 0.0
      %698 = vmatpush.msra.mxu0 0.0
      %699 = vmatpush.msra.mxu0 0.0
      %700 = vmatpush.msra.mxu0 0.0
      %701 = vmatpush.msra.mxu0 0.0
      %702 = vmatpush.msra.mxu0 0.0
      %703 = vmatpush.msra.mxu0 0.0
      %704 = vmatpush.msra.mxu0 0.0
      %705 = vmatpush.msra.mxu0 0.0
      %706 = vmatpush.msra.mxu0 %v648
      %707 = vmatpush.msra.mxu0 %v646
      %708 = vmatmul.f32.gmra.mxu0 %v664
      %v709 = vpop.f32.mrf.mxu0
      %v710 = vadd.f32 %v656, %v709
      %711 = vmatmul.f32.gmra.mxu0 %v667
      %v712 = vpop.f32.mrf.mxu0
      %v713 = vadd.f32 %v661, %v712
      %714 = vdwg.mxu0
      %v715 = vmax.f32 %v687, 0.0
      %v716 = vmax.f32 %v710, 0.0
      %v717 = vmax.f32 %v690, 0.0
      %v718 = vmax.f32 %v713, 0.0
      %719 = vst [vmem:[%s415] sm:$0xff] %v715
      %720 = vst [vmem:[%s415 + $0x8] sm:$0xff] %v716
      %721 = vst [vmem:[%s415 + $0x10] sm:$0xff] %v717
      %722 = vst [vmem:[%s415 + $0x18] sm:$0xff] %v718
      %s723 = smul.u32 2, %s26
      %p724 = scmp.lt.s32.totalorder %s25, 1
      %s725 = scalar_select %p724, %s25, 1
      %p726 = scmp.lt.s32.totalorder %s723, 1
      %s727 = scalar_select %p726, %s723, 1
      %s728 = smul.addr %s725, 2
      %s729 = sadd.s32 %s727, %s728
      %s730 = smul.addr %s729, 4
      %s731 = scalar_lea.vmem %s7, %s730
      %s732 = smul.u32 2, %s26
      %p733 = scmp.lt.s32.totalorder %s25, 1
      %s734 = scalar_select %p733, %s25, 1
      %p735 = scmp.lt.s32.totalorder %s732, 1
      %s736 = scalar_select %p735, %s732, 1
      %s737 = smul.addr %s734, 2
      %s738 = sadd.s32 %s736, %s737
      %s739 = scalar_lea.vmem %s8, %s738
      %s740 = smul.u32 2, %s26
      %p741 = scmp.lt.s32.totalorder %s25, 1
      %s742 = scalar_select %p741, %s25, 1
      %p743 = scmp.lt.s32.totalorder %s740, 1
      %s744 = scalar_select %p743, %s740, 1
      %s745 = smul.addr %s742, 4
      %s746 = sadd.s32 %s744, %s745
      %s747 = smul.addr %s746, 8
      %s748 = scalar_lea.vmem %s9, %s747
      // Predicated region
      $region49: #{region_proposal_network.1} parent=47 // pred_check
        %p749 = pneg %p207
      $region50: #{region_proposal_network.1} parent=47 // pred_check_branch
        %751 = sbr.rel (%p749) target = $region52
      $region51: #{region_proposal_network.1} parent=47 // pred_region
        %s752 = smul.u32 2, %s26
      $region52: #{region_proposal_network.1} parent=47 // pred_fallthru
        _
      // Predicated region
      $region53: #{region_proposal_network.1} parent=47 // pred_check
        %p753 = pneg %p235
      $region54: #{region_proposal_network.1} parent=47 // pred_check_branch
        %755 = sbr.rel (%p753) target = $region56
      $region55: #{region_proposal_network.1} parent=47 // pred_region
        %s756 = smul.u32 2, %s26
      $region56: #{region_proposal_network.1} parent=47 // pred_fallthru
        _
      // Predicated region
      $region57: #{region_proposal_network.1} parent=47 // pred_check
        %p757 = pneg %p263
      $region58: #{region_proposal_network.1} parent=47 // pred_check_branch
        %759 = sbr.rel (%p757) target = $region60
      $region59: #{region_proposal_network.1} parent=47 // pred_region
        %s760 = smul.u32 2, %s26
      $region60: #{region_proposal_network.1} parent=47 // pred_fallthru
        _
    $region48: #{region_proposal_network.1} parent=5 // pred_fallthru
      _
    %p761 = scmp.le.s32.totalorder 2, %s16
    // Predicated region
    $region61: #{region_proposal_network.1} parent=5 // pred_check
      %p762 = pneg %p761
    $region62: #{region_proposal_network.1} parent=5 // pred_check_branch
      %764 = sbr.rel (%p762) target = $region64
    $region63: #{region_proposal_network.1} parent=5 // pred_region
      %s765 = ssub.s32 %s16, 2
      // Predicated region
      $region65: #{region_proposal_network.1} parent=63 // pred_check
        %p766 = pneg %p213
      $region66: #{region_proposal_network.1} parent=63 // pred_check_branch
        %768 = sbr.rel (%p766) target = $region68
      $region67: #{region_proposal_network.1} parent=63 // pred_region
        %s769 = smul.u32 2, %s28
        %p770 = scmp.lt.s32.totalorder %s27, 1
        %s771 = scalar_select %p770, %s27, 1
        %p772 = scmp.lt.s32.totalorder %s769, 1
        %s773 = scalar_select %p772, %s769, 1
        %s774 = smul.addr %s771, 2
        %s775 = sadd.s32 %s773, %s774
        %s776 = smul.addr %s775, 4
        %s777 = scalar_lea.vmem %s7, %s776
      $region68: #{region_proposal_network.1} parent=63 // pred_fallthru
        _
      // Predicated region
      $region69: #{region_proposal_network.1} parent=63 // pred_check
        %p778 = pneg %p241
      $region70: #{region_proposal_network.1} parent=63 // pred_check_branch
        %780 = sbr.rel (%p778) target = $region72
      $region71: #{region_proposal_network.1} parent=63 // pred_region
        %s781 = smul.u32 2, %s28
        %p782 = scmp.lt.s32.totalorder %s27, 1
        %s783 = scalar_select %p782, %s27, 1
        %p784 = scmp.lt.s32.totalorder %s781, 1
        %s785 = scalar_select %p784, %s781, 1
        %s786 = smul.addr %s783, 2
        %s787 = sadd.s32 %s785, %s786
        %s788 = scalar_lea.vmem %s8, %s787
      $region72: #{region_proposal_network.1} parent=63 // pred_fallthru
        _
      // Predicated region
      $region73: #{region_proposal_network.1} parent=63 // pred_check
        %p789 = pneg %p269
      $region74: #{region_proposal_network.1} parent=63 // pred_check_branch
        %791 = sbr.rel (%p789) target = $region76
      $region75: #{region_proposal_network.1} parent=63 // pred_region
        %s792 = smul.u32 2, %s28
        %p793 = scmp.lt.s32.totalorder %s27, 1
        %s794 = scalar_select %p793, %s27, 1
        %p795 = scmp.lt.s32.totalorder %s792, 1
        %s796 = scalar_select %p795, %s792, 1
        %s797 = smul.addr %s794, 4
        %s798 = sadd.s32 %s796, %s797
        %s799 = smul.addr %s798, 8
        %s800 = scalar_lea.vmem %s9, %s799
      $region76: #{region_proposal_network.1} parent=63 // pred_fallthru
        _
    $region64: #{region_proposal_network.1} parent=5 // pred_fallthru
      _
  $region6: #{region_proposal_network.1} parent=0 // loop_footer
    %s20 = sadd.s32 1, %s16
  $region7: #{region_proposal_network.1} parent=0 // loop_footer_branch
    %15 = sbr.rel target = $region3
  $region8: #{region_proposal_network.1} parent=0 // loop_exit
    _

</llo_original>
